<compile_context>
chip_gen: v7x
topology: tpu7x:2x2x1
jax: 0.10.0
libtpu: 0.0.40
codegen_flags: <defaults>
</compile_context>

<pallas_src>
import jax
import jax.numpy as jnp
from jax import lax
from jax.experimental import pallas as pl
from jax.experimental.pallas import tpu as pltpu


def fcn2_folded_kernel(x_ref, weff_ref, o_ref):
    # out[0, b] = sum_d w_eff[0, d] * x[b, d]
    # Both operands are K(=d)-last, the MXU-native contraction, so the
    # streamed x tile needs no per-step transpose; result (1, tb) is
    # lane-dense (no masked 1-wide stores).
    o_ref[...] = lax.dot_general(
        weff_ref[...], x_ref[...],
        dimension_numbers=(((1,), (1,)), ((), ())),
        preferred_element_type=jnp.float32,
    ).astype(o_ref.dtype)


def _batch_tile(B):
    # Lane-dense (1, tb) output blocks require tb to be a multiple of 128.
    # Prefer >= 4 grid steps (>= 2 per TensorCore under v7x megacore sharding)
    # so the x DMA overlaps compute; otherwise the largest 128-multiple tile
    # that still gives >= 2 steps; finally a single padded 128-row tile.
    for tb in (1024, 512, 256, 128):
        if pl.cdiv(B, tb) >= 4:
            return tb
    for tb in (256, 128):
        if pl.cdiv(B, tb) >= 2:
            return tb
    return 128


@jax.jit
def fcn_2_layers_forward(x, w1, w2):
    """x: (B, d) f32; w1: (N, d) f32 (lin1.weight); w2: (1, N) f32 (lin2.weight)."""
    B, d = x.shape

    # Algebraic fold (exact for this module: forward applies no activation).
    # Tiny (1, N) @ (N, d) matmul done once in XLA, full f32 precision so the
    # reference check stays at 1e-4.
    w_eff = jnp.dot(w2, w1, precision=lax.Precision.HIGHEST)      # (1, d)

    tb = _batch_tile(B)
    Bp = pl.cdiv(B, tb) * tb
    if Bp != B:
        # TODO(synk): a masked last tile would avoid this extra HBM copy of x
        # for batches that are not a multiple of 128.
        x = jnp.pad(x, ((0, Bp - B), (0, 0)))
    grid = (Bp // tb,)

    # VMEM: double-buffered x tiles dominate; w_eff / out rows are KB-scale.
    # 32 MiB is the universally-safe scoped ceiling (v7x default); raise it on
    # v5e/v6e (128 MiB physical) only if a much larger d tile is ever needed.
    vmem_needed = 2 * tb * d * 4 + 4 * 128 * max(d, 128)
    vmem_limit = min(max(2 * vmem_needed, 16 * 1024 * 1024), 32 * 1024 * 1024)

    out_row = pl.pallas_call(
        fcn2_folded_kernel,
        out_shape=jax.ShapeDtypeStruct((1, Bp), x.dtype),
        grid=grid,
        in_specs=[
            pl.BlockSpec((tb, d), lambda i: (i, 0)),   # x batch tile (streamed)
            pl.BlockSpec((1, d), lambda i: (0, 0)),    # w_eff, grid-constant
        ],
        out_specs=pl.BlockSpec((1, tb), lambda i: (0, i)),  # lane-dense row
        compiler_params=pltpu.CompilerParams(
            dimension_semantics=("parallel",),
            vmem_limit_bytes=vmem_limit),
    )(x, w_eff)

    # (1, Bp) row-major has the same memory order as (Bp, 1): free reshape;
    # then drop any padded rows.
    return out_row.reshape(Bp, 1)[:B]


def init_params(key, d, N, init_out, init_hidden):
    # Mirrors nn.init.normal_(lin1.weight, 0, init_hidden**0.5) and
    # nn.init.normal_(lin2.weight, 0, init_out**0.5); deterministic via PRNGKey.
    k1, k2 = jax.random.split(key)
    w1 = jax.random.normal(k1, (N, d), dtype=jnp.float32) * (init_hidden ** 0.5)
    w2 = jax.random.normal(k2, (1, N), dtype=jnp.float32) * (init_out ** 0.5)
    return w1, w2


if __name__ == "__main__":
    # Small but tiling-friendly shapes: grid=(2,) over the batch, the full
    # feature axis resident per tile.
    B, d, N = 256, 128, 256
    init_out, init_hidden = 1.0 / N, 1.0 / d

    key = jax.random.PRNGKey(0)
    kx, kp = jax.random.split(key)
    x = jax.random.normal(kx, (B, d), dtype=jnp.float32)
    w1, w2 = init_params(kp, d, N, init_out, init_hidden)

    out = fcn_2_layers_forward(x, w1, w2)
    out = jax.block_until_ready(out)

    # Reference check (same math as the PyTorch forward: x @ W1.T @ W2.T).
    h_ref = jnp.einsum("bd,nd->bn", x, w1, precision=lax.Precision.HIGHEST)
    ref = jnp.einsum("bn,on->bo", h_ref, w2, precision=lax.Precision.HIGHEST)
    assert out.shape == (B, 1)
    assert jnp.allclose(out, ref, atol=1e-4, rtol=1e-4), \
        float(jnp.max(jnp.abs(out - ref)))

    print("KERNEL_OK")
</pallas_src>

<mosaic_0001>
module attributes {stable_mosaic.version = 11 : i64} {
  func.func @fcn2_folded_kernel(%arg0: i32, %arg1: memref<128x128xf32, #tpu.memory_space<vmem>>, %arg2: memref<1x128xf32, #tpu.memory_space<vmem>>, %arg3: memref<1x128xf32, #tpu.memory_space<vmem>>) attributes {dimension_semantics = [#tpu.dimension_semantics<parallel>], iteration_bounds = array<i64: 2>, scalar_prefetch = 0 : i64, scratch_operands = 0 : i64, tpu.core_type = #tpu.core_type<tc>, window_params = [{transform_indices = @transform_0, window_bounds = array<i64: 128, 128>}, {pipeline_mode = #tpu.pipeline_mode<synchronous>, transform_indices = @transform_1, window_bounds = array<i64: 1, 128>}, {transform_indices = @transform_2, window_bounds = array<i64: 1, 128>}]} {
    %c0 = arith.constant 0 : index
    %c0_0 = arith.constant 0 : index
    %0 = vector.load %arg2[%c0, %c0_0] : memref<1x128xf32, #tpu.memory_space<vmem>>, vector<1x128xf32>
    %c0_1 = arith.constant 0 : index
    %c0_2 = arith.constant 0 : index
    %1 = vector.load %arg1[%c0_1, %c0_2] : memref<128x128xf32, #tpu.memory_space<vmem>>, vector<128x128xf32>
    %cst = arith.constant dense<0.000000e+00> : vector<1x128xf32>
    %2 = tpu.matmul %0, %1, %cst {dimension_numbers = #tpu.dot_dimension_numbers<[1], [1], [0], [0], [0, 0, 1, 0], [], []>} : vector<1x128xf32>, vector<128x128xf32>, vector<1x128xf32> -> vector<1x128xf32>
    %c0_3 = arith.constant 0 : index
    %c0_4 = arith.constant 0 : index
    %3 = vector.load %arg3[%c0_3, %c0_4] : memref<1x128xf32, #tpu.memory_space<vmem>>, vector<1x128xf32>
    tpu.vector_store %arg3[%c0_3, %c0_4], %2 {strides = array<i32>} : memref<1x128xf32, #tpu.memory_space<vmem>>, vector<1x128xf32>,
    return
  }
  func.func @transform_0(%arg0: i32) -> (i32, i32) {
    %c0_i32 = arith.constant 0 : i32
    %c0_i32_0 = arith.constant 0 : i32
    return %arg0, %c0_i32 : i32, i32
  }
  func.func @transform_1(%arg0: i32) -> (i32, i32) {
    %c0_i32 = arith.constant 0 : i32
    %c0_i32_0 = arith.constant 0 : i32
    %c0_i32_1 = arith.constant 0 : i32
    return %c0_i32, %c0_i32_0 : i32, i32
  }
  func.func @transform_2(%arg0: i32) -> (i32, i32) {
    %c0_i32 = arith.constant 0 : i32
    %c0_i32_0 = arith.constant 0 : i32
    return %c0_i32, %arg0 : i32, i32
  }
}

</mosaic_0001>

<llo_original>
// kernel: fcn_2_layers_forward.1
$region0: #{fcn_2_layers_forward.1}
  #allocation0 [shape = 'u32[]', space=smem, size = 0x4, offset = 0x4, fixed_abs, tag = 'smem constant byte address 0x4 - core index']
  #allocation1 [shape = 'u32[144,128]{1,0:T(1,128)}', space=vmem, size = 0x12000, scoped, tag = 'internal scratch']
  %s0 = inlined_call_operand.vmem [shape: f32[256,128], index: 0, kind: input, shape index: {}]
  %s1 = inlined_call_operand.vmem [shape: f32[1,128], index: 1, kind: input, shape index: {}]
  %s2 = inlined_call_operand.hbm [shape: f32[1,256], index: 2, kind: output, shape index: {}]
  %s3 = sld [smem:[#allocation0]]
  $region41: #{fcn_2_layers_forward.1} parent=0
    _
  %s5 = ssub.s32 1, %s3
  %s6 = scalar_select 0, %s5, %s3
  $region1: #{fcn_2_layers_forward.1} parent=0
    #allocation2 [shape = 'u8[1024]{0}', space=vmem, size = 0x400, scoped, tag = 'output window, operand 0']
    #allocation3 [shape = 's32[2]{0}', space=sflag, size = 0x8, scoped, tag = 'scoped memory for fcn_2_layers_forward.1']
    %7 = vsyncpa [#allocation3], 0
    %s8 = scalar_lea.sflag [#allocation3], 1
    %9 = vsyncpa %s8, 0
    loop: start=0, step=1, limit=4
    $region2: #{fcn_2_layers_forward.1} parent=1 // loop_pre_header
      _
    $region3: #{fcn_2_layers_forward.1} parent=1 // loop_header
      %s11 = sphi 0, %s15
      %p12 = scmp.ge.s32.totalorder %s11, 4
      %s21 = sphi 0, %s23
      %s24 = sphi 0, %s21
      %s25 = sphi 0, %s24
      %s41 = sphi 0, %s25
      %s45 = sphi 0, %s45
      %s47 = sphi 0, %s45
      %s48 = sphi 0, %s47
      %s62 = sphi 0, %s48
      %s68 = sphi 0, %s70
      %s71 = sphi 0, %s68
      %s72 = sphi 0, %s71
      %s88 = sphi 0, %s72
    $region4: #{fcn_2_layers_forward.1} parent=1 // loop_header_branch
      %14 = sbr.rel (%p12) target = $region8
    $region5: #{fcn_2_layers_forward.1} parent=1 // loop_body
      %s16 = ssub.s32 %s11, 1
      %s17 = ssub.s32 %s11, 2
      %s18 = sadd.s32 %s11, 1
      %s19 = ssub.s32 %s11, %s18
      %p20 = scmp.eq.s32.totalorder %s19, 0
      %s22 = sadd.s32 %s21, 1
      %s23 = scalar_select %p20, %s21, %s22
      %p26 = pneg %p20
      %p27 = scmp.eq.s32.totalorder %s11, 1
      %p28 = por %p26, %p27
      %p29 = scmp.ne.s32.totalorder %s21, %s24
      %p30 = scmp.eq.s32.totalorder %s11, 0
      %p31 = por %p29, %p30
      %p32 = scmp.ne.s32.totalorder %s21, %s24
      %p33 = scmp.eq.s32.totalorder %s16, 1
      %p34 = por %p32, %p33
      %p35 = scmp.ne.s32.totalorder %s24, %s25
      %p36 = scmp.eq.s32.totalorder %s16, 0
      %p37 = por %p35, %p36
      %p38 = scmp.ne.s32.totalorder %s24, %s25
      %p39 = scmp.eq.s32.totalorder %s17, 1
      %p40 = por %p38, %p39
      %p42 = scmp.ne.s32.totalorder %s25, %s41
      %p43 = scmp.eq.s32.totalorder %s17, 0
      %p44 = por %p42, %p43
      %s46 = sadd.s32 %s45, 1
      %p49 = scmp.eq.s32.totalorder %s11, 1
      %p50 = scmp.ne.s32.totalorder %s45, %s47
      %p51 = scmp.eq.s32.totalorder %s11, 0
      %p52 = por %p50, %p51
      %p53 = scmp.ne.s32.totalorder %s45, %s47
      %p54 = scmp.eq.s32.totalorder %s16, 1
      %p55 = por %p53, %p54
      %p56 = scmp.ne.s32.totalorder %s47, %s48
      %p57 = scmp.eq.s32.totalorder %s16, 0
      %p58 = por %p56, %p57
      %p59 = scmp.ne.s32.totalorder %s47, %s48
      %p60 = scmp.eq.s32.totalorder %s17, 1
      %p61 = por %p59, %p60
      %p63 = scmp.ne.s32.totalorder %s48, %s62
      %p64 = scmp.eq.s32.totalorder %s17, 0
      %p65 = por %p63, %p64
      %s66 = ssub.s32 %s11, %s18
      %p67 = scmp.eq.s32.totalorder %s66, 0
      %s69 = sadd.s32 %s68, 1
      %s70 = scalar_select %p67, %s68, %s69
      %p73 = pneg %p67
      %p74 = scmp.eq.s32.totalorder %s11, 1
      %p75 = por %p73, %p74
      %p76 = scmp.ne.s32.totalorder %s68, %s71
      %p77 = scmp.eq.s32.totalorder %s11, 0
      %p78 = por %p76, %p77
      %p79 = scmp.ne.s32.totalorder %s68, %s71
      %p80 = scmp.eq.s32.totalorder %s16, 1
      %p81 = por %p79, %p80
      %p82 = scmp.ne.s32.totalorder %s71, %s72
      %p83 = scmp.eq.s32.totalorder %s16, 0
      %p84 = por %p82, %p83
      %p85 = scmp.ne.s32.totalorder %s71, %s72
      %p86 = scmp.eq.s32.totalorder %s17, 1
      %p87 = por %p85, %p86
      %p89 = scmp.ne.s32.totalorder %s72, %s88
      %p90 = scmp.eq.s32.totalorder %s17, 0
      %p91 = por %p89, %p90
      %p92 = scmp.le.s32.totalorder 1, %s11
      %p93 = scmp.lt.s32.totalorder %s11, 3
      %p94 = pnand %p92, %p93
      %p95 = pneg %p94
      // Predicated region
      $region9: #{fcn_2_layers_forward.1} parent=5 // pred_check
        _
      $region10: #{fcn_2_layers_forward.1} parent=5 // pred_check_branch
        %97 = sbr.rel (%p94) target = $region12
      $region11: #{fcn_2_layers_forward.1} parent=5 // pred_region
        %s98 = ssub.s32 %s11, 1
        // Predicated region
        $region13: #{fcn_2_layers_forward.1} parent=11 // pred_check
          %p99 = pneg %p58
        $region14: #{fcn_2_layers_forward.1} parent=11 // pred_check_branch
          %101 = sbr.rel (%p99) target = $region16
        $region15: #{fcn_2_layers_forward.1} parent=11 // pred_region
          _
        $region16: #{fcn_2_layers_forward.1} parent=11 // pred_fallthru
          _
      $region12: #{fcn_2_layers_forward.1} parent=5 // pred_fallthru
        _
      %p102 = scmp.lt.s32.totalorder %s11, 2
      // Predicated region
      $region17: #{fcn_2_layers_forward.1} parent=5 // pred_check
        %p103 = pneg %p102
      $region18: #{fcn_2_layers_forward.1} parent=5 // pred_check_branch
        %105 = sbr.rel (%p103) target = $region20
      $region19: #{fcn_2_layers_forward.1} parent=5 // pred_region
        // Predicated region
        $region21: #{fcn_2_layers_forward.1} parent=19 // pred_check
          %p106 = pneg %p31
        $region22: #{fcn_2_layers_forward.1} parent=19 // pred_check_branch
          %108 = sbr.rel (%p106) target = $region24
        $region23: #{fcn_2_layers_forward.1} parent=19 // pred_region
          %s109 = smul.u32 16, %s11
          %p110 = scmp.lt.s32.totalorder %s109, 31
          %s111 = scalar_select %p110, %s109, 31
          %s112 = smul.addr %s111, 8
          %s113 = scalar_lea.vmem %s0, %s112
          %s114 = smul.u32 16, %s11
        $region24: #{fcn_2_layers_forward.1} parent=19 // pred_fallthru
          _
      $region20: #{fcn_2_layers_forward.1} parent=5 // pred_fallthru
        _
      %p115 = scmp.le.s32.totalorder 1, %s11
      %p116 = scmp.lt.s32.totalorder %s11, 3
      %p117 = pnand %p115, %p116
      %p118 = pneg %p117
      // Predicated region
      $region25: #{fcn_2_layers_forward.1} parent=5 // pred_check
        _
      $region26: #{fcn_2_layers_forward.1} parent=5 // pred_check_branch
        %120 = sbr.rel (%p117) target = $region28
      $region27: #{fcn_2_layers_forward.1} parent=5 // pred_region
        %s121 = ssub.s32 %s11, 1
        %s122 = smul.u32 16, %s16
        %p123 = scmp.lt.s32.totalorder %s122, 31
        %s124 = scalar_select %p123, %s122, 31
        %s125 = smul.addr %s124, 8
        %s126 = scalar_lea.vmem %s0, %s125
        %p127 = pneg %p37
        %p128 = pneg %p34
        %p129 = pneg %p58
        %p130 = pneg %p55
        %p131 = pneg %p84
        %p132 = pneg %p81
        %s133 = sand.u32 %s71, 1
        %s134 = scalar_lea.sflag [#allocation3], %s133
        %s135 = sand.u32 %s71, 1
        %s136 = scalar_lea.vmem [#allocation2], %s135
        %s137 = smul.u32 16, %s16
        %p138 = scmp.lt.s32.totalorder %s137, 31
        %s139 = scalar_select %p138, %s137, 31
        %s140 = smul.addr %s139, 8
        %s141 = scalar_lea.vmem %s0, %s140
        %s142 = smul.u32 16, %s16
        %v143 = vld [vmem:[%s1] sm:$0x1]
        %v144 = vld [vmem:[%s141] sm:$0xff]
        %v145 = vld [vmem:[%s141 + $0x8] sm:$0xff]
        %v146 = vld [vmem:[%s141 + $0x10] sm:$0xff]
        %v147 = vld [vmem:[%s141 + $0x18] sm:$0xff]
        %v148 = vld [vmem:[%s141 + $0x20] sm:$0xff]
        %v149 = vld [vmem:[%s141 + $0x28] sm:$0xff]
        %v150 = vld [vmem:[%s141 + $0x30] sm:$0xff]
        %v151 = vld [vmem:[%s141 + $0x38] sm:$0xff]
        %v152 = vld [vmem:[%s141 + $0x40] sm:$0xff]
        %v153 = vld [vmem:[%s141 + $0x48] sm:$0xff]
        %v154 = vld [vmem:[%s141 + $0x50] sm:$0xff]
        %v155 = vld [vmem:[%s141 + $0x58] sm:$0xff]
        %v156 = vld [vmem:[%s141 + $0x60] sm:$0xff]
        %v157 = vld [vmem:[%s141 + $0x68] sm:$0xff]
        %v158 = vld [vmem:[%s141 + $0x70] sm:$0xff]
        %v159 = vld [vmem:[%s141 + $0x78] sm:$0xff]
        %160 = vmatprep.subr.mxu0 0.0
        %161 = vmatpush1.xpose.msra.mxu0 %v144
        %162 = vmatprep.subr.mxu0 0.0
        %163 = vmatpush1.xpose.msra.mxu0 %v145
        %164 = vmatprep.subr.mxu0 0.0
        %165 = vmatpush1.xpose.msra.mxu0 %v146
        %166 = vmatprep.subr.mxu0 0.0
        %167 = vmatpush1.xpose.msra.mxu0 %v147
        %168 = vmatprep.subr.mxu0 0.0
        %169 = vmatpush1.xpose.msra.mxu0 %v148
        %170 = vmatprep.subr.mxu0 0.0
        %171 = vmatpush1.xpose.msra.mxu0 %v149
        %172 = vmatprep.subr.mxu0 0.0
        %173 = vmatpush1.xpose.msra.mxu0 %v150
        %174 = vmatprep.subr.mxu0 0.0
        %175 = vmatpush1.xpose.msra.mxu0 %v151
        %176 = vmatprep.subr.mxu0 0.0
        %177 = vmatpush1.xpose.msra.mxu0 %v152
        %178 = vmatprep.subr.mxu0 0.0
        %179 = vmatpush1.xpose.msra.mxu0 %v153
        %180 = vmatprep.subr.mxu0 0.0
        %181 = vmatpush1.xpose.msra.mxu0 %v154
        %182 = vmatprep.subr.mxu0 0.0
        %183 = vmatpush1.xpose.msra.mxu0 %v155
        %184 = vmatprep.subr.mxu0 0.0
        %185 = vmatpush1.xpose.msra.mxu0 %v156
        %186 = vmatprep.subr.mxu0 0.0
        %187 = vmatpush1.xpose.msra.mxu0 %v157
        %188 = vmatprep.subr.mxu0 0.0
        %189 = vmatpush1.xpose.msra.mxu0 %v158
        %190 = vmatprep.subr.mxu0 0.0
        %191 = vmatpush1.xpose.msra.mxu0 %v159
        %192 = vmatprep.subr.mxu0 0.0
        %193 = vmatpush1.xpose.msra.mxu0 0.0
        %194 = vmatprep.subr.mxu0 0.0
        %195 = vmatpush1.xpose.msra.mxu0 0.0
        %196 = vmatprep.subr.mxu0 0.0
        %197 = vmatpush1.xpose.msra.mxu0 0.0
        %198 = vmatprep.subr.mxu0 0.0
        %199 = vmatpush1.xpose.msra.mxu0 0.0
        %200 = vmatprep.subr.mxu0 0.0
        %201 = vmatpush1.xpose.msra.mxu0 0.0
        %202 = vmatprep.subr.mxu0 0.0
        %203 = vmatpush1.xpose.msra.mxu0 0.0
        %204 = vmatprep.subr.mxu0 0.0
        %205 = vmatpush1.xpose.msra.mxu0 0.0
        %206 = vmatprep.subr.mxu0 0.0
        %207 = vmatpush1.xpose.msra.mxu0 0.0
        %208 = vmatprep.subr.mxu0 0.0
        %209 = vmatpush1.xpose.msra.mxu0 0.0
        %210 = vmatprep.subr.mxu0 0.0
        %211 = vmatpush1.xpose.msra.mxu0 0.0
        %212 = vmatprep.subr.mxu0 0.0
        %213 = vmatpush1.xpose.msra.mxu0 0.0
        %214 = vmatprep.subr.mxu0 0.0
        %215 = vmatpush1.xpose.msra.mxu0 0.0
        %216 = vmatprep.subr.mxu0 0.0
        %217 = vmatpush1.xpose.msra.mxu0 0.0
        %218 = vmatprep.subr.mxu0 0.0
        %219 = vmatpush1.xpose.msra.mxu0 0.0
        %220 = vmatprep.subr.mxu0 0.0
        %221 = vmatpush1.xpose.msra.mxu0 0.0
        %222 = vmatprep.subr.mxu0 0.0
        %223 = vmatpush1.xpose.msra.mxu0 0.0
        %224 = vmatprep.mubr.f32.mxu0 0.0
        %225 = vmatmul.mubr.f32.gmra.mrb[0].mxu0 %v143
        %v226 = vpop.f32.mrb[0].mxu0
        %v227 = vadd.f32 0.0, %v226
        %v228 = vpop.f32.mrb[0].mxu0
        %229 = vdwg.mxu0
        %230 = vst [vmem:[%s136] sm:$0x1] %v227
        %s231 = sand.u32 %s71, 1
        %s232 = scalar_lea.sflag [#allocation3], %s231
        %s233 = sand.u32 %s71, 1
        %s234 = scalar_lea.vmem [#allocation2], %s233
        // Predicated region
        $region29: #{fcn_2_layers_forward.1} parent=27 // pred_check
          %p235 = pneg %p81
        $region30: #{fcn_2_layers_forward.1} parent=27 // pred_check_branch
          %237 = sbr.rel (%p235) target = $region32
        $region31: #{fcn_2_layers_forward.1} parent=27 // pred_region
          %s239 = ssub.s32 16, 16
          %240 = vsyncadd %s232, %s239
          %s241 = smul.addr %s16, 16
          %s242 = scalar_lea.hbm %s2, %s241
          %s244 = sshll.u32 %s234, 4
          %s245 = int_to_ptr.vmem [resolvable:$true] %s244
          %247 = dma.vmem_to_hbm [thread:$0]  %s245, 16, %s242, %s232
        $region32: #{fcn_2_layers_forward.1} parent=27 // pred_fallthru
          _
      $region28: #{fcn_2_layers_forward.1} parent=5 // pred_fallthru
        _
      %p248 = scmp.le.s32.totalorder 2, %s11
      // Predicated region
      $region33: #{fcn_2_layers_forward.1} parent=5 // pred_check
        %p249 = pneg %p248
      $region34: #{fcn_2_layers_forward.1} parent=5 // pred_check_branch
        %251 = sbr.rel (%p249) target = $region36
      $region35: #{fcn_2_layers_forward.1} parent=5 // pred_region
        %s252 = ssub.s32 %s11, 2
        // Predicated region
        $region37: #{fcn_2_layers_forward.1} parent=35 // pred_check
          %p253 = pneg %p87
        $region38: #{fcn_2_layers_forward.1} parent=35 // pred_check_branch
          %255 = sbr.rel (%p253) target = $region40
        $region39: #{fcn_2_layers_forward.1} parent=35 // pred_region
          %s256 = sand.u32 %s72, 1
          %s257 = scalar_lea.sflag [#allocation3], %s256
          %s258 = sand.u32 %s72, 1
          %s259 = scalar_lea.vmem [#allocation2], %s258
          %260 = dma.done %s257, 16
        $region40: #{fcn_2_layers_forward.1} parent=35 // pred_fallthru
          _
      $region36: #{fcn_2_layers_forward.1} parent=5 // pred_fallthru
        _
    $region6: #{fcn_2_layers_forward.1} parent=1 // loop_footer
      %s15 = sadd.s32 1, %s11
    $region7: #{fcn_2_layers_forward.1} parent=1 // loop_footer_branch
      %10 = sbr.rel target = $region3
    $region8: #{fcn_2_layers_forward.1} parent=1 // loop_exit
      _
    %261 = vsyncpa [#allocation3], 1
    %s262 = scalar_lea.sflag [#allocation3], 1
    %263 = vsyncpa %s262, 1

</llo_original>
